<compile_context>
chip_gen: v7x
topology: tpu7x:2x2x1
jax: 0.10.0
libtpu: 0.0.40
codegen_flags: <defaults>
</compile_context>

<pallas_src>
import functools
from math import sqrt

import jax
import jax.numpy as jnp
from jax.experimental import pallas as pl
from jax.experimental.pallas import tpu as pltpu

_SQRT_2_OVER_PI = 0.7978845608028654
_INV_SQRT_2 = 0.7071067811865476


def _ffn_kernel(x_ref, lnw_ref, lnb_ref, w1_ref, b1_ref, w2_ref, b2_ref,
                o_ref, xn_ref, acc_ref, *, gelu):
    h_idx = pl.program_id(1)

    @pl.when(h_idx == 0)
    def _():
        # LayerNorm once per token tile (f32 math, eps matches nn.LayerNorm's
        # 1e-5), cached as bf16 for the MXU, and reset the f32 accumulator.
        x = x_ref[...].astype(jnp.float32)
        mean = jnp.mean(x, axis=-1, keepdims=True)
        centered = x - mean
        var = jnp.mean(centered * centered, axis=-1, keepdims=True)
        xn = centered * jax.lax.rsqrt(var + 1e-5)
        xn = xn * lnw_ref[...].astype(jnp.float32) + lnb_ref[...].astype(jnp.float32)
        xn_ref[...] = xn.astype(jnp.bfloat16)
        acc_ref[...] = jnp.zeros_like(acc_ref)

    # Linear 1 chunk (F -> tile_h): bf16 operands on the MXU, f32 accumulation.
    h = jnp.dot(xn_ref[...], w1_ref[...], preferred_element_type=jnp.float32)
    h = h + b1_ref[...].astype(jnp.float32)

    if gelu == "tanh":
        # tanh-form GELU: transcendental goes to the EUP (its own VLIW slot)
        # and hides under the matmuls.  <~3e-4 abs deviation from exact erf.
        h = 0.5 * h * (1.0 + jnp.tanh(_SQRT_2_OVER_PI * (h + 0.044715 * h * h * h)))
    else:
        # Exact erf GELU (nn.GELU() default): VALU polynomial over (tm, tile_h).
        h = 0.5 * h * (1.0 + jax.lax.erf(h * jnp.float32(_INV_SQRT_2)))

    # Linear 2 chunk (tile_h -> F): accumulate into the f32 scratch.
    acc_ref[...] += jnp.dot(h.astype(jnp.bfloat16), w2_ref[...],
                            preferred_element_type=jnp.float32)

    @pl.when(h_idx == pl.num_programs(1) - 1)
    def _():
        o_ref[...] = (acc_ref[...] + b2_ref[...].astype(jnp.float32)).astype(o_ref.dtype)


def _round_up(n, m):
    return ((n + m - 1) // m) * m


def _vmem_capacity_bytes():
    try:
        return int(pltpu.get_tpu_info().vmem_capacity_bytes)
    except Exception:
        return 64 << 20  # smallest across v5e/v6e/v7x: safe fallback


def _pick_tiles(M, F, H, x_itemsize, tile_m, tile_h, vmem_cap):
    # Token tile: as large as requested, clamped to the (8-aligned) problem.
    tm = min(tile_m, _round_up(M, 8))
    # v7x has 2 TensorCores; a single-step "parallel" grid leaves one idle.
    if _round_up(M, tm) // tm == 1 and tm >= 16 and tm % 16 == 0:
        tm //= 2
    Mp = _round_up(M, tm)

    Hp = _round_up(H, 128)
    if tile_h is None:
        # Size the hidden chunk so double-buffered bf16 w1/w2 slices plus the
        # f32 hidden chunk (and its bf16 cast) fit in ~70% of VMEM alongside
        # the fixed x/out/scratch footprint.
        budget = int(0.70 * vmem_cap)
        fixed = (4 * tm * F * x_itemsize   # x + out tiles, double buffered
                 + 4 * tm * F              # f32 accumulator scratch
                 + 2 * tm * F              # bf16 LayerNorm cache scratch
                 + 32 * F)                 # LN params / b2 blocks (generous)
        per_th = 8 * F + 6 * tm            # bf16 w1+w2 slices (2 bufs) + hidden
        th = max(128, (max(budget - fixed, 0) // per_th // 128) * 128)
        if th >= 256:
            th = (th // 256) * 256         # MXU-friendly (2x256^2 on v6e/v7x)
        th = min(th, Hp)
    else:
        th = min(_round_up(tile_h, 128), Hp)
    # Avoid padding the hidden dim: step down to a 128-multiple dividing Hp
    # (128 always divides Hp, so this terminates on a valid divisor).
    while th > 128 and Hp % th != 0:
        th -= 128
    return tm, Mp, th, Hp


@functools.partial(jax.jit, static_argnames=("tile_m", "tile_h", "gelu"))
def feed_forward_block(x, ln_w, ln_b, w1, b1, w2, b2, *,
                       tile_m=256, tile_h=None, gelu="tanh"):
    """Fused LayerNorm -> Linear -> GELU -> Linear (Dropout p=0 is identity).

    x: (B, S, F). ln_w/ln_b: (F,). w1: (F, H), b1: (H,), w2: (H, F), b2: (F,).
    Pass w1/w2 already cast to bfloat16 to avoid a per-call HBM cast.
    """
    B, S, F = x.shape
    H = w1.shape[1]
    M = B * S

    vmem_cap = _vmem_capacity_bytes()
    x_itemsize = x.dtype.itemsize
    tm, Mp, th, Hp = _pick_tiles(M, F, H, x_itemsize, tile_m, tile_h, vmem_cap)

    x2d = x.reshape(M, F)
    if Mp != M:
        x2d = jnp.pad(x2d, ((0, Mp - M), (0, 0)))

    # bf16 weights (no-op if the caller already holds bf16, as recommended).
    w1b = w1.astype(jnp.bfloat16)
    w2b = w2.astype(jnp.bfloat16)
    b1r = b1.reshape(1, H).astype(jnp.float32)
    if Hp != H:
        # Zero-padded hidden columns give h = 0 and zero w2 rows, so padded
        # chunks contribute nothing to the output.
        w1b = jnp.pad(w1b, ((0, 0), (0, Hp - H)))
        w2b = jnp.pad(w2b, ((0, Hp - H), (0, 0)))
        b1r = jnp.pad(b1r, ((0, 0), (0, Hp - H)))

    lnw = ln_w.reshape(1, F)
    lnb = ln_b.reshape(1, F)
    b2r = b2.reshape(1, F)

    # Explicit scoped-VMEM budget, capped below physical capacity (v7x: 64 MiB).
    est = (4 * tm * F * x_itemsize          # x + out tiles, 2 buffers each
           + 4 * F * th + 4 * th * F        # bf16 w1/w2 slices, 2 buffers each
           + 4 * tm * F + 2 * tm * F        # f32 acc + bf16 xn scratch
           + 6 * tm * th                    # f32 hidden chunk + its bf16 cast
           + 8 * (2 * F + th + F))          # LN params, b1, b2 blocks
    vmem_limit = min(max(int(1.25 * est) + (4 << 20), 16 << 20),
                     int(0.85 * vmem_cap))

    out = pl.pallas_call(
        functools.partial(_ffn_kernel, gelu=gelu),
        out_shape=jax.ShapeDtypeStruct((Mp, F), x.dtype),
        grid_spec=pltpu.PrefetchScalarGridSpec(
            num_scalar_prefetch=0,
            grid=(Mp // tm, Hp // th),
            in_specs=[
                pl.BlockSpec((tm, F), lambda i, h: (i, 0)),   # x (DMA'd once per i)
                pl.BlockSpec((1, F), lambda i, h: (0, 0)),    # ln weight
                pl.BlockSpec((1, F), lambda i, h: (0, 0)),    # ln bias
                pl.BlockSpec((F, th), lambda i, h: (0, h)),   # w1 slice (streamed)
                pl.BlockSpec((1, th), lambda i, h: (0, h)),   # b1 slice
                pl.BlockSpec((th, F), lambda i, h: (h, 0)),   # w2 slice (streamed)
                pl.BlockSpec((1, F), lambda i, h: (0, 0)),    # b2
            ],
            out_specs=pl.BlockSpec((tm, F), lambda i, h: (i, 0)),
            scratch_shapes=[
                pltpu.VMEM((tm, F), jnp.bfloat16),   # cached LayerNorm output
                pltpu.VMEM((tm, F), jnp.float32),    # second-matmul accumulator
            ],
        ),
        compiler_params=pltpu.CompilerParams(
            dimension_semantics=("parallel", "arbitrary"),
            vmem_limit_bytes=vmem_limit,
        ),
    )(x2d, lnw, lnb, w1b, b1r, w2b, b2r)

    return out[:M].reshape(B, S, F)


def _init_params(key, features, multiplier):
    hidden = features * multiplier
    k1, k2, k3, k4 = jax.random.split(key, 4)
    # LayerNorm: weight=1, bias=0 (PyTorch default).
    ln_w = jnp.ones((features,), jnp.float32)
    ln_b = jnp.zeros((features,), jnp.float32)
    # Linear init ~ U(-1/sqrt(fan_in), 1/sqrt(fan_in)), stored as (in, out).
    lim1 = 1.0 / sqrt(features)
    w1 = jax.random.uniform(k1, (features, hidden), jnp.float32, -lim1, lim1)
    b1 = jax.random.uniform(k2, (hidden,), jnp.float32, -lim1, lim1)
    lim2 = 1.0 / sqrt(hidden)
    w2 = jax.random.uniform(k3, (hidden, features), jnp.float32, -lim2, lim2)
    b2 = jax.random.uniform(k4, (features,), jnp.float32, -lim2, lim2)
    return ln_w, ln_b, w1, b1, w2, b2


def _reference(x, ln_w, ln_b, w1, b1, w2, b2):
    # PyTorch-semantics reference (exact erf GELU, f32 LN/bias) mirroring the
    # kernel's matmul precision policy (bf16 operands, f32 accumulation).
    x = x.astype(jnp.float32)
    mean = jnp.mean(x, axis=-1, keepdims=True)
    var = jnp.mean((x - mean) ** 2, axis=-1, keepdims=True)
    xn = (x - mean) * jax.lax.rsqrt(var + 1e-5) * ln_w + ln_b
    h = jnp.dot(xn.astype(jnp.bfloat16), w1.astype(jnp.bfloat16),
                preferred_element_type=jnp.float32) + b1
    h = 0.5 * h * (1.0 + jax.lax.erf(h * jnp.float32(_INV_SQRT_2)))
    y = jnp.dot(h.astype(jnp.bfloat16), w2.astype(jnp.bfloat16),
                preferred_element_type=jnp.float32) + b2
    return y


if __name__ == "__main__":
    batch, seq, features, multiplier = 2, 8, 128, 4
    key = jax.random.PRNGKey(0)
    kx, kp = jax.random.split(key)
    x = jax.random.normal(kx, (batch, seq, features), jnp.float32)
    ln_w, ln_b, w1, b1, w2, b2 = _init_params(kp, features, multiplier)

    # Cast weights to bf16 once, outside the jitted forward (avoids streaming
    # an f32->bf16 convert through HBM on every call).
    w1b = w1.astype(jnp.bfloat16)
    w2b = w2.astype(jnp.bfloat16)

    # tile_h=256 forces two hidden-dim chunks at this toy size (H=512) so the
    # accumulator init / accumulate / finalize path is exercised.
    y = feed_forward_block(x, ln_w, ln_b, w1b, b1, w2b, b2, tile_h=256)
    jax.block_until_ready(y)

    y_ref = _reference(x, ln_w, ln_b, w1, b1, w2, b2)
    assert y.shape == x.shape
    # Tolerance covers bf16 matmul rounding + the tanh-GELU approximation.
    assert jnp.allclose(y, y_ref, atol=1e-2, rtol=1e-2), "mismatch vs reference"
    print("KERNEL_OK")
</pallas_src>

<mosaic_0001>
module attributes {stable_mosaic.version = 11 : i64} {
  func.func @_ffn_kernel(%arg0: i32, %arg1: i32, %arg2: memref<8x128xf32, #tpu.memory_space<vmem>>, %arg3: memref<1x128xf32, #tpu.memory_space<vmem>>, %arg4: memref<1x128xf32, #tpu.memory_space<vmem>>, %arg5: memref<128x256xbf16, #tpu.memory_space<vmem>>, %arg6: memref<1x256xf32, #tpu.memory_space<vmem>>, %arg7: memref<256x128xbf16, #tpu.memory_space<vmem>>, %arg8: memref<1x128xf32, #tpu.memory_space<vmem>>, %arg9: memref<8x128xf32, #tpu.memory_space<vmem>>, %arg10: memref<8x128xbf16, #tpu.memory_space<vmem>>, %arg11: memref<8x128xf32, #tpu.memory_space<vmem>>) attributes {dimension_semantics = [#tpu.dimension_semantics<parallel>, #tpu.dimension_semantics<arbitrary>], iteration_bounds = array<i64: 2, 2>, scalar_prefetch = 0 : i64, scratch_operands = 2 : i64, tpu.core_type = #tpu.core_type<tc>, window_params = [{transform_indices = @transform_0, window_bounds = array<i64: 8, 128>}, {pipeline_mode = #tpu.pipeline_mode<synchronous>, transform_indices = @transform_1, window_bounds = array<i64: 1, 128>}, {pipeline_mode = #tpu.pipeline_mode<synchronous>, transform_indices = @transform_2, window_bounds = array<i64: 1, 128>}, {transform_indices = @transform_3, window_bounds = array<i64: 128, 256>}, {transform_indices = @transform_4, window_bounds = array<i64: 1, 256>}, {transform_indices = @transform_5, window_bounds = array<i64: 256, 128>}, {pipeline_mode = #tpu.pipeline_mode<synchronous>, transform_indices = @transform_6, window_bounds = array<i64: 1, 128>}, {transform_indices = @transform_7, window_bounds = array<i64: 8, 128>}]} {
    %c0_i32 = arith.constant 0 : i32
    %0 = arith.cmpi eq, %arg1, %c0_i32 : i32
    %1 = arith.extui %0 : i1 to i32
    %c0_i32_0 = arith.constant 0 : i32
    %2 = arith.cmpi ne, %1, %c0_i32_0 : i32
    scf.if %2 {
      %c0_18 = arith.constant 0 : index
      %c0_19 = arith.constant 0 : index
      %31 = vector.load %arg2[%c0_18, %c0_19] : memref<8x128xf32, #tpu.memory_space<vmem>>, vector<8x128xf32>
      %cst_20 = arith.constant dense<0.000000e+00> : vector<8xf32>
      %32 = vector.multi_reduction <add>, %31, %cst_20 [1] : vector<8x128xf32> to vector<8xf32>
      %33 = vector.shape_cast %32 : vector<8xf32> to vector<8x1xf32>
      %cst_21 = arith.constant 1.280000e+02 : f32
      %34 = vector.broadcast %cst_21 : f32 to vector<8x1xf32>
      %35 = arith.divf %33, %34 : vector<8x1xf32>
      %36 = vector.broadcast %35 : vector<8x1xf32> to vector<8x128xf32>
      %37 = arith.subf %31, %36 : vector<8x128xf32>
      %38 = arith.mulf %37, %37 : vector<8x128xf32>
      %cst_22 = arith.constant dense<0.000000e+00> : vector<8xf32>
      %39 = vector.multi_reduction <add>, %38, %cst_22 [1] : vector<8x128xf32> to vector<8xf32>
      %40 = vector.shape_cast %39 : vector<8xf32> to vector<8x1xf32>
      %cst_23 = arith.constant 1.280000e+02 : f32
      %41 = vector.broadcast %cst_23 : f32 to vector<8x1xf32>
      %42 = arith.divf %40, %41 : vector<8x1xf32>
      %cst_24 = arith.constant 9.99999974E-6 : f32
      %43 = vector.broadcast %cst_24 : f32 to vector<8x1xf32>
      %44 = arith.addf %42, %43 : vector<8x1xf32>
      %45 = math.rsqrt %44 : vector<8x1xf32>
      %46 = vector.broadcast %45 : vector<8x1xf32> to vector<8x128xf32>
      %47 = arith.mulf %37, %46 : vector<8x128xf32>
      %c0_25 = arith.constant 0 : index
      %c0_26 = arith.constant 0 : index
      %48 = vector.load %arg3[%c0_25, %c0_26] : memref<1x128xf32, #tpu.memory_space<vmem>>, vector<1x128xf32>
      %49 = vector.broadcast %48 : vector<1x128xf32> to vector<8x128xf32>
      %50 = arith.mulf %47, %49 : vector<8x128xf32>
      %c0_27 = arith.constant 0 : index
      %c0_28 = arith.constant 0 : index
      %51 = vector.load %arg4[%c0_27, %c0_28] : memref<1x128xf32, #tpu.memory_space<vmem>>, vector<1x128xf32>
      %52 = vector.broadcast %51 : vector<1x128xf32> to vector<8x128xf32>
      %53 = arith.addf %50, %52 : vector<8x128xf32>
      %54 = arith.truncf %53 : vector<8x128xf32> to vector<8x128xbf16>
      %c0_29 = arith.constant 0 : index
      %c0_30 = arith.constant 0 : index
      %55 = vector.load %arg10[%c0_29, %c0_30] : memref<8x128xbf16, #tpu.memory_space<vmem>>, vector<8x128xbf16>
      tpu.vector_store %arg10[%c0_29, %c0_30], %54 {strides = array<i32>} : memref<8x128xbf16, #tpu.memory_space<vmem>>, vector<8x128xbf16>,
      %cst_31 = arith.constant 0.000000e+00 : f32
      %56 = vector.broadcast %cst_31 : f32 to vector<8x128xf32>
      %c0_32 = arith.constant 0 : index
      %c0_33 = arith.constant 0 : index
      %57 = vector.load %arg11[%c0_32, %c0_33] : memref<8x128xf32, #tpu.memory_space<vmem>>, vector<8x128xf32>
      tpu.vector_store %arg11[%c0_32, %c0_33], %56 {strides = array<i32>} : memref<8x128xf32, #tpu.memory_space<vmem>>, vector<8x128xf32>,
    } else {
    }
    %c0 = arith.constant 0 : index
    %c0_1 = arith.constant 0 : index
    %3 = vector.load %arg10[%c0, %c0_1] : memref<8x128xbf16, #tpu.memory_space<vmem>>, vector<8x128xbf16>
    %c0_2 = arith.constant 0 : index
    %c0_3 = arith.constant 0 : index
    %4 = vector.load %arg5[%c0_2, %c0_3] : memref<128x256xbf16, #tpu.memory_space<vmem>>, vector<128x256xbf16>
    %cst = arith.constant dense<0.000000e+00> : vector<8x256xf32>
    %5 = tpu.matmul %3, %4, %cst {dimension_numbers = #tpu.dot_dimension_numbers<[1], [0], [0], [1], [0, 0, 1, 1], [], []>} : vector<8x128xbf16>, vector<128x256xbf16>, vector<8x256xf32> -> vector<8x256xf32>
    %c0_4 = arith.constant 0 : index
    %c0_5 = arith.constant 0 : index
    %6 = vector.load %arg6[%c0_4, %c0_5] : memref<1x256xf32, #tpu.memory_space<vmem>>, vector<1x256xf32>
    %7 = vector.broadcast %6 : vector<1x256xf32> to vector<8x256xf32>
    %8 = arith.addf %5, %7 : vector<8x256xf32>
    %cst_6 = arith.constant 5.000000e-01 : f32
    %9 = vector.broadcast %cst_6 : f32 to vector<8x256xf32>
    %10 = arith.mulf %9, %8 : vector<8x256xf32>
    %cst_7 = arith.constant 4.471500e-02 : f32
    %11 = vector.broadcast %cst_7 : f32 to vector<8x256xf32>
    %12 = arith.mulf %11, %8 : vector<8x256xf32>
    %13 = arith.mulf %12, %8 : vector<8x256xf32>
    %14 = arith.mulf %13, %8 : vector<8x256xf32>
    %15 = arith.addf %8, %14 : vector<8x256xf32>
    %cst_8 = arith.constant 0.797884583 : f32
    %16 = vector.broadcast %cst_8 : f32 to vector<8x256xf32>
    %17 = arith.mulf %16, %15 : vector<8x256xf32>
    %18 = math.tanh %17 : vector<8x256xf32>
    %cst_9 = arith.constant 1.000000e+00 : f32
    %19 = vector.broadcast %cst_9 : f32 to vector<8x256xf32>
    %20 = arith.addf %19, %18 : vector<8x256xf32>
    %21 = arith.mulf %10, %20 : vector<8x256xf32>
    %c0_10 = arith.constant 0 : index
    %c0_11 = arith.constant 0 : index
    %22 = vector.load %arg11[%c0_10, %c0_11] : memref<8x128xf32, #tpu.memory_space<vmem>>, vector<8x128xf32>
    %23 = arith.truncf %21 : vector<8x256xf32> to vector<8x256xbf16>
    %c0_12 = arith.constant 0 : index
    %c0_13 = arith.constant 0 : index
    %24 = vector.load %arg7[%c0_12, %c0_13] : memref<256x128xbf16, #tpu.memory_space<vmem>>, vector<256x128xbf16>
    %cst_14 = arith.constant dense<0.000000e+00> : vector<8x128xf32>
    %25 = tpu.matmul %23, %24, %cst_14 {dimension_numbers = #tpu.dot_dimension_numbers<[1], [0], [0], [1], [0, 0, 1, 1], [], []>} : vector<8x256xbf16>, vector<256x128xbf16>, vector<8x128xf32> -> vector<8x128xf32>
    %26 = arith.addf %22, %25 : vector<8x128xf32>
    %c0_15 = arith.constant 0 : index
    %c0_16 = arith.constant 0 : index
    %27 = vector.load %arg11[%c0_15, %c0_16] : memref<8x128xf32, #tpu.memory_space<vmem>>, vector<8x128xf32>
    tpu.vector_store %arg11[%c0_15, %c0_16], %26 {strides = array<i32>} : memref<8x128xf32, #tpu.memory_space<vmem>>, vector<8x128xf32>,
    %c1_i32 = arith.constant 1 : i32
    %28 = arith.cmpi eq, %arg1, %c1_i32 : i32
    %29 = arith.extui %28 : i1 to i32
    %c0_i32_17 = arith.constant 0 : i32
    %30 = arith.cmpi ne, %29, %c0_i32_17 : i32
    scf.if %30 {
      %c0_18 = arith.constant 0 : index
      %c0_19 = arith.constant 0 : index
      %31 = vector.load %arg11[%c0_18, %c0_19] : memref<8x128xf32, #tpu.memory_space<vmem>>, vector<8x128xf32>
      %c0_20 = arith.constant 0 : index
      %c0_21 = arith.constant 0 : index
      %32 = vector.load %arg8[%c0_20, %c0_21] : memref<1x128xf32, #tpu.memory_space<vmem>>, vector<1x128xf32>
      %33 = vector.broadcast %32 : vector<1x128xf32> to vector<8x128xf32>
      %34 = arith.addf %31, %33 : vector<8x128xf32>
      %c0_22 = arith.constant 0 : index
      %c0_23 = arith.constant 0 : index
      %35 = vector.load %arg9[%c0_22, %c0_23] : memref<8x128xf32, #tpu.memory_space<vmem>>, vector<8x128xf32>
      tpu.vector_store %arg9[%c0_22, %c0_23], %34 {strides = array<i32>} : memref<8x128xf32, #tpu.memory_space<vmem>>, vector<8x128xf32>,
    } else {
    }
    return
  }
  func.func @transform_0(%arg0: i32, %arg1: i32) -> (i32, i32) {
    %c0_i32 = arith.constant 0 : i32
    %c0_i32_0 = arith.constant 0 : i32
    return %arg0, %c0_i32 : i32, i32
  }
  func.func @transform_1(%arg0: i32, %arg1: i32) -> (i32, i32) {
    %c0_i32 = arith.constant 0 : i32
    %c0_i32_0 = arith.constant 0 : i32
    %c0_i32_1 = arith.constant 0 : i32
    return %c0_i32, %c0_i32_0 : i32, i32
  }
  func.func @transform_2(%arg0: i32, %arg1: i32) -> (i32, i32) {
    %c0_i32 = arith.constant 0 : i32
    %c0_i32_0 = arith.constant 0 : i32
    %c0_i32_1 = arith.constant 0 : i32
    return %c0_i32, %c0_i32_0 : i32, i32
  }
  func.func @transform_3(%arg0: i32, %arg1: i32) -> (i32, i32) {
    %c0_i32 = arith.constant 0 : i32
    %c0_i32_0 = arith.constant 0 : i32
    return %c0_i32, %arg1 : i32, i32
  }
  func.func @transform_4(%arg0: i32, %arg1: i32) -> (i32, i32) {
    %c0_i32 = arith.constant 0 : i32
    %c0_i32_0 = arith.constant 0 : i32
    return %c0_i32, %arg1 : i32, i32
  }
  func.func @transform_5(%arg0: i32, %arg1: i32) -> (i32, i32) {
    %c0_i32 = arith.constant 0 : i32
    %c0_i32_0 = arith.constant 0 : i32
    return %arg1, %c0_i32 : i32, i32
  }
  func.func @transform_6(%arg0: i32, %arg1: i32) -> (i32, i32) {
    %c0_i32 = arith.constant 0 : i32
    %c0_i32_0 = arith.constant 0 : i32
    %c0_i32_1 = arith.constant 0 : i32
    return %c0_i32, %c0_i32_0 : i32, i32
  }
  func.func @transform_7(%arg0: i32, %arg1: i32) -> (i32, i32) {
    %c0_i32 = arith.constant 0 : i32
    %c0_i32_0 = arith.constant 0 : i32
    return %arg0, %c0_i32 : i32, i32
  }
}

</mosaic_0001>

<llo_original>
// kernel: feed_forward_block.1
$region0: #{feed_forward_block.1}
  #allocation0 [shape = 'u32[]', space=smem, size = 0x4, offset = 0x4, fixed_abs, tag = 'smem constant byte address 0x4 - core index']
  #allocation1 [shape = 'u32[144,128]{1,0:T(1,128)}', space=vmem, size = 0x12000, scoped, tag = 'internal scratch']
  #allocation2 [shape = 'bf16[8,128]{1,0:T(8,128)(2,1)}', space=vmem, size = 0x800, scoped, tag = 'scratch operand']
  #allocation3 [shape = 'f32[8,128]{1,0:T(8,128)}', space=vmem, size = 0x1000, scoped, tag = 'scratch operand']
  %s0 = inlined_call_operand.vmem [shape: f32[16,128], index: 0, kind: input, shape index: {}]
  %s1 = inlined_call_operand.vmem [shape: f32[1,128], index: 1, kind: input, shape index: {}]
  %s2 = inlined_call_operand.vmem [shape: f32[1,128], index: 2, kind: input, shape index: {}]
  %s3 = inlined_call_operand.hbm [shape: bf16[128,512], index: 3, kind: input, shape index: {}]
  %s4 = inlined_call_operand.vmem [shape: f32[1,512], index: 4, kind: input, shape index: {}]
  %s5 = inlined_call_operand.hbm [shape: bf16[512,128], index: 5, kind: input, shape index: {}]
  %s6 = inlined_call_operand.vmem [shape: f32[1,128], index: 6, kind: input, shape index: {}]
  %s7 = inlined_call_operand.hbm [shape: f32[16,128], index: 7, kind: output, shape index: {}]
  %s8 = sld [smem:[#allocation0]]
  $region77: #{feed_forward_block.1} parent=0
    _
  %s10 = ssub.s32 1, %s8
  %s11 = scalar_select 0, %s10, %s8
  $region1: #{feed_forward_block.1} parent=0
    #allocation4 [shape = 'u8[131072]{0}', space=vmem, size = 0x20000, scoped, tag = 'input window, operand 3']
    #allocation5 [shape = 's32[2]{0}', space=sflag, size = 0x8, scoped, tag = 'scoped memory for feed_forward_block.1']
    #allocation6 [shape = 's32[2]{0}', space=sflag, size = 0x8, scoped, tag = 'scoped memory for feed_forward_block.1']
    #allocation7 [shape = 'u8[131072]{0}', space=vmem, size = 0x20000, scoped, tag = 'input window, operand 5']
    #allocation8 [shape = 's32[2]{0}', space=sflag, size = 0x8, scoped, tag = 'scoped memory for feed_forward_block.1']
    #allocation9 [shape = 'u8[8192]{0}', space=vmem, size = 0x2000, scoped, tag = 'output window, operand 0']
    %12 = vsyncpa [#allocation5], 0
    %s13 = scalar_lea.sflag [#allocation5], 1
    %14 = vsyncpa %s13, 0
    %15 = vsyncpa [#allocation8], 0
    %s16 = scalar_lea.sflag [#allocation8], 1
    %17 = vsyncpa %s16, 0
    %18 = vsyncpa [#allocation6], 0
    %s19 = scalar_lea.sflag [#allocation6], 1
    %20 = vsyncpa %s19, 0
    loop: start=0, step=1, limit=6
    $region2: #{feed_forward_block.1} parent=1 // loop_pre_header
      _
    $region3: #{feed_forward_block.1} parent=1 // loop_header
      %s22 = sphi 0, %s26
      %p23 = scmp.ge.s32.totalorder %s22, 6
      %s29 = sphi 0, %s41
      %s30 = sphi 0, %s37
      %s31 = sphi 0, %s29
      %s32 = sphi 0, %s30
      %s33 = sphi 0, %s31
      %s34 = sphi 0, %s32
      %s44 = sphi 0, %s46
      %s47 = sphi 0, %s44
      %s48 = sphi 0, %s47
      %s64 = sphi 0, %s48
      %s68 = sphi 0, %s68
      %s70 = sphi 0, %s68
      %s71 = sphi 0, %s70
      %s85 = sphi 0, %s71
      %s89 = sphi 0, %s89
      %s91 = sphi 0, %s89
      %s92 = sphi 0, %s91
      %s106 = sphi 0, %s92
      %s112 = sphi 0, %s114
      %s115 = sphi 0, %s112
      %s116 = sphi 0, %s115
      %s132 = sphi 0, %s116
      %s138 = sphi 0, %s140
      %s141 = sphi 0, %s138
      %s142 = sphi 0, %s141
      %s158 = sphi 0, %s142
      %s164 = sphi 0, %s166
      %s167 = sphi 0, %s164
      %s168 = sphi 0, %s167
      %s184 = sphi 0, %s168
      %s188 = sphi 0, %s188
      %s190 = sphi 0, %s188
      %s191 = sphi 0, %s190
      %s205 = sphi 0, %s191
      %s211 = sphi 0, %s213
      %s214 = sphi 0, %s211
      %s215 = sphi 0, %s214
      %s231 = sphi 0, %s215
    $region4: #{feed_forward_block.1} parent=1 // loop_header_branch
      %25 = sbr.rel (%p23) target = $region8
    $region5: #{feed_forward_block.1} parent=1 // loop_body
      %s27 = ssub.s32 %s22, 1
      %s28 = ssub.s32 %s22, 2
      %s35 = sadd.s32 1, %s30
      %p36 = scmp.ge.s32.totalorder %s35, 2
      %s37 = scalar_select %p36, 0, %s35
      %s38 = sadd.s32 1, %s29
      %s39 = scalar_select %p36, %s38, %s29
      %p40 = scmp.ge.s32.totalorder %s39, 2
      %s41 = scalar_select %p40, 0, %s39
      %s42 = ssub.s32 %s29, %s41
      %p43 = scmp.eq.s32.totalorder %s42, 0
      %s45 = sadd.s32 %s44, 1
      %s46 = scalar_select %p43, %s44, %s45
      %p49 = pneg %p43
      %p50 = scmp.eq.s32.totalorder %s22, 3
      %p51 = por %p49, %p50
      %p52 = scmp.ne.s32.totalorder %s44, %s47
      %p53 = scmp.eq.s32.totalorder %s22, 0
      %p54 = por %p52, %p53
      %p55 = scmp.ne.s32.totalorder %s44, %s47
      %p56 = scmp.eq.s32.totalorder %s27, 3
      %p57 = por %p55, %p56
      %p58 = scmp.ne.s32.totalorder %s47, %s48
      %p59 = scmp.eq.s32.totalorder %s27, 0
      %p60 = por %p58, %p59
      %p61 = scmp.ne.s32.totalorder %s47, %s48
      %p62 = scmp.eq.s32.totalorder %s28, 3
      %p63 = por %p61, %p62
      %p65 = scmp.ne.s32.totalorder %s48, %s64
      %p66 = scmp.eq.s32.totalorder %s28, 0
      %p67 = por %p65, %p66
      %s69 = sadd.s32 %s68, 1
      %p72 = scmp.eq.s32.totalorder %s22, 3
      %p73 = scmp.ne.s32.totalorder %s68, %s70
      %p74 = scmp.eq.s32.totalorder %s22, 0
      %p75 = por %p73, %p74
      %p76 = scmp.ne.s32.totalorder %s68, %s70
      %p77 = scmp.eq.s32.totalorder %s27, 3
      %p78 = por %p76, %p77
      %p79 = scmp.ne.s32.totalorder %s70, %s71
      %p80 = scmp.eq.s32.totalorder %s27, 0
      %p81 = por %p79, %p80
      %p82 = scmp.ne.s32.totalorder %s70, %s71
      %p83 = scmp.eq.s32.totalorder %s28, 3
      %p84 = por %p82, %p83
      %p86 = scmp.ne.s32.totalorder %s71, %s85
      %p87 = scmp.eq.s32.totalorder %s28, 0
      %p88 = por %p86, %p87
      %s90 = sadd.s32 %s89, 1
      %p93 = scmp.eq.s32.totalorder %s22, 3
      %p94 = scmp.ne.s32.totalorder %s89, %s91
      %p95 = scmp.eq.s32.totalorder %s22, 0
      %p96 = por %p94, %p95
      %p97 = scmp.ne.s32.totalorder %s89, %s91
      %p98 = scmp.eq.s32.totalorder %s27, 3
      %p99 = por %p97, %p98
      %p100 = scmp.ne.s32.totalorder %s91, %s92
      %p101 = scmp.eq.s32.totalorder %s27, 0
      %p102 = por %p100, %p101
      %p103 = scmp.ne.s32.totalorder %s91, %s92
      %p104 = scmp.eq.s32.totalorder %s28, 3
      %p105 = por %p103, %p104
      %p107 = scmp.ne.s32.totalorder %s92, %s106
      %p108 = scmp.eq.s32.totalorder %s28, 0
      %p109 = por %p107, %p108
      %s110 = ssub.s32 %s30, %s37
      %p111 = scmp.eq.s32.totalorder %s110, 0
      %s113 = sadd.s32 %s112, 1
      %s114 = scalar_select %p111, %s112, %s113
      %p117 = pneg %p111
      %p118 = scmp.eq.s32.totalorder %s22, 3
      %p119 = por %p117, %p118
      %p120 = scmp.ne.s32.totalorder %s112, %s115
      %p121 = scmp.eq.s32.totalorder %s22, 0
      %p122 = por %p120, %p121
      %p123 = scmp.ne.s32.totalorder %s112, %s115
      %p124 = scmp.eq.s32.totalorder %s27, 3
      %p125 = por %p123, %p124
      %p126 = scmp.ne.s32.totalorder %s115, %s116
      %p127 = scmp.eq.s32.totalorder %s27, 0
      %p128 = por %p126, %p127
      %p129 = scmp.ne.s32.totalorder %s115, %s116
      %p130 = scmp.eq.s32.totalorder %s28, 3
      %p131 = por %p129, %p130
      %p133 = scmp.ne.s32.totalorder %s116, %s132
      %p134 = scmp.eq.s32.totalorder %s28, 0
      %p135 = por %p133, %p134
      %s136 = ssub.s32 %s30, %s37
      %p137 = scmp.eq.s32.totalorder %s136, 0
      %s139 = sadd.s32 %s138, 1
      %s140 = scalar_select %p137, %s138, %s139
      %p143 = pneg %p137
      %p144 = scmp.eq.s32.totalorder %s22, 3
      %p145 = por %p143, %p144
      %p146 = scmp.ne.s32.totalorder %s138, %s141
      %p147 = scmp.eq.s32.totalorder %s22, 0
      %p148 = por %p146, %p147
      %p149 = scmp.ne.s32.totalorder %s138, %s141
      %p150 = scmp.eq.s32.totalorder %s27, 3
      %p151 = por %p149, %p150
      %p152 = scmp.ne.s32.totalorder %s141, %s142
      %p153 = scmp.eq.s32.totalorder %s27, 0
      %p154 = por %p152, %p153
      %p155 = scmp.ne.s32.totalorder %s141, %s142
      %p156 = scmp.eq.s32.totalorder %s28, 3
      %p157 = por %p155, %p156
      %p159 = scmp.ne.s32.totalorder %s142, %s158
      %p160 = scmp.eq.s32.totalorder %s28, 0
      %p161 = por %p159, %p160
      %s162 = ssub.s32 %s30, %s37
      %p163 = scmp.eq.s32.totalorder %s162, 0
      %s165 = sadd.s32 %s164, 1
      %s166 = scalar_select %p163, %s164, %s165
      %p169 = pneg %p163
      %p170 = scmp.eq.s32.totalorder %s22, 3
      %p171 = por %p169, %p170
      %p172 = scmp.ne.s32.totalorder %s164, %s167
      %p173 = scmp.eq.s32.totalorder %s22, 0
      %p174 = por %p172, %p173
      %p175 = scmp.ne.s32.totalorder %s164, %s167
      %p176 = scmp.eq.s32.totalorder %s27, 3
      %p177 = por %p175, %p176
      %p178 = scmp.ne.s32.totalorder %s167, %s168
      %p179 = scmp.eq.s32.totalorder %s27, 0
      %p180 = por %p178, %p179
      %p181 = scmp.ne.s32.totalorder %s167, %s168
      %p182 = scmp.eq.s32.totalorder %s28, 3
      %p183 = por %p181, %p182
      %p185 = scmp.ne.s32.totalorder %s168, %s184
      %p186 = scmp.eq.s32.totalorder %s28, 0
      %p187 = por %p185, %p186
      %s189 = sadd.s32 %s188, 1
      %p192 = scmp.eq.s32.totalorder %s22, 3
      %p193 = scmp.ne.s32.totalorder %s188, %s190
      %p194 = scmp.eq.s32.totalorder %s22, 0
      %p195 = por %p193, %p194
      %p196 = scmp.ne.s32.totalorder %s188, %s190
      %p197 = scmp.eq.s32.totalorder %s27, 3
      %p198 = por %p196, %p197
      %p199 = scmp.ne.s32.totalorder %s190, %s191
      %p200 = scmp.eq.s32.totalorder %s27, 0
      %p201 = por %p199, %p200
      %p202 = scmp.ne.s32.totalorder %s190, %s191
      %p203 = scmp.eq.s32.totalorder %s28, 3
      %p204 = por %p202, %p203
      %p206 = scmp.ne.s32.totalorder %s191, %s205
      %p207 = scmp.eq.s32.totalorder %s28, 0
      %p208 = por %p206, %p207
      %s209 = ssub.s32 %s29, %s41
      %p210 = scmp.eq.s32.totalorder %s209, 0
      %s212 = sadd.s32 %s211, 1
      %s213 = scalar_select %p210, %s211, %s212
      %p216 = pneg %p210
      %p217 = scmp.eq.s32.totalorder %s22, 3
      %p218 = por %p216, %p217
      %p219 = scmp.ne.s32.totalorder %s211, %s214
      %p220 = scmp.eq.s32.totalorder %s22, 0
      %p221 = por %p219, %p220
      %p222 = scmp.ne.s32.totalorder %s211, %s214
      %p223 = scmp.eq.s32.totalorder %s27, 3
      %p224 = por %p222, %p223
      %p225 = scmp.ne.s32.totalorder %s214, %s215
      %p226 = scmp.eq.s32.totalorder %s27, 0
      %p227 = por %p225, %p226
      %p228 = scmp.ne.s32.totalorder %s214, %s215
      %p229 = scmp.eq.s32.totalorder %s28, 3
      %p230 = por %p228, %p229
      %p232 = scmp.ne.s32.totalorder %s215, %s231
      %p233 = scmp.eq.s32.totalorder %s28, 0
      %p234 = por %p232, %p233
      %p235 = scmp.le.s32.totalorder 1, %s22
      %p236 = scmp.lt.s32.totalorder %s22, 5
      %p237 = pnand %p235, %p236
      %p238 = pneg %p237
      // Predicated region
      $region9: #{feed_forward_block.1} parent=5 // pred_check
        _
      $region10: #{feed_forward_block.1} parent=5 // pred_check_branch
        %240 = sbr.rel (%p237) target = $region12
      $region11: #{feed_forward_block.1} parent=5 // pred_region
        %s241 = ssub.s32 %s22, 1
        // Predicated region
        $region13: #{feed_forward_block.1} parent=11 // pred_check
          %p242 = pneg %p81
        $region14: #{feed_forward_block.1} parent=11 // pred_check_branch
          %244 = sbr.rel (%p242) target = $region16
        $region15: #{feed_forward_block.1} parent=11 // pred_region
          _
        $region16: #{feed_forward_block.1} parent=11 // pred_fallthru
          _
        // Predicated region
        $region17: #{feed_forward_block.1} parent=11 // pred_check
          %p245 = pneg %p102
        $region18: #{feed_forward_block.1} parent=11 // pred_check_branch
          %247 = sbr.rel (%p245) target = $region20
        $region19: #{feed_forward_block.1} parent=11 // pred_region
          _
        $region20: #{feed_forward_block.1} parent=11 // pred_fallthru
          _
        // Predicated region
        $region21: #{feed_forward_block.1} parent=11 // pred_check
          %p248 = pneg %p201
        $region22: #{feed_forward_block.1} parent=11 // pred_check_branch
          %250 = sbr.rel (%p248) target = $region24
        $region23: #{feed_forward_block.1} parent=11 // pred_region
          _
        $region24: #{feed_forward_block.1} parent=11 // pred_fallthru
          _
      $region12: #{feed_forward_block.1} parent=5 // pred_fallthru
        _
      %p251 = scmp.lt.s32.totalorder %s22, 4
      // Predicated region
      $region25: #{feed_forward_block.1} parent=5 // pred_check
        %p252 = pneg %p251
      $region26: #{feed_forward_block.1} parent=5 // pred_check_branch
        %254 = sbr.rel (%p252) target = $region28
      $region27: #{feed_forward_block.1} parent=5 // pred_region
        // Predicated region
        $region29: #{feed_forward_block.1} parent=27 // pred_check
          %p255 = pneg %p54
        $region30: #{feed_forward_block.1} parent=27 // pred_check_branch
          %257 = sbr.rel (%p255) target = $region32
        $region31: #{feed_forward_block.1} parent=27 // pred_region
          %p258 = scmp.lt.s32.totalorder %s29, 1
          %s259 = scalar_select %p258, %s29, 1
          %s260 = smul.addr %s259, 8
          %s261 = scalar_lea.vmem %s0, %s260
        $region32: #{feed_forward_block.1} parent=27 // pred_fallthru
          _
        // Predicated region
        $region33: #{feed_forward_block.1} parent=27 // pred_check
          %p262 = pneg %p122
        $region34: #{feed_forward_block.1} parent=27 // pred_check_branch
          %264 = sbr.rel (%p262) target = $region36
        $region35: #{feed_forward_block.1} parent=27 // pred_region
          %s265 = sand.u32 %s112, 1
          %s266 = scalar_lea.sflag [#allocation5], %s265
          %s267 = sand.u32 %s112, 1
          %s268 = smul.addr %s267, 128
          %s269 = scalar_lea.vmem [#allocation4], %s268
          %s270 = smul.u32 2, %s30
          %s272 = ssub.s32 2048, 2048
          %273 = vsyncadd %s266, %s272
          %s274 = smul.addr %s270, 64
          %s275 = scalar_lea.hbm %s3, %s274
          %s276 = sshll.u32 %s269, 4
          %s277 = int_to_ptr.vmem [resolvable:$true] %s276
          %282 = dma.hbm_to_vmem [thread:$0]  %s275, 2048, %s277, %s266, 256, 128, 8
        $region36: #{feed_forward_block.1} parent=27 // pred_fallthru
          _
        // Predicated region
        $region37: #{feed_forward_block.1} parent=27 // pred_check
          %p283 = pneg %p148
        $region38: #{feed_forward_block.1} parent=27 // pred_check_branch
          %285 = sbr.rel (%p283) target = $region40
        $region39: #{feed_forward_block.1} parent=27 // pred_region
          %s286 = smul.u32 2, %s30
          %p287 = scmp.lt.s32.totalorder %s286, 3
          %s288 = scalar_select %p287, %s286, 3
          %s289 = scalar_lea.vmem %s4, %s288
          %s290 = smul.u32 2, %s30
        $region40: #{feed_forward_block.1} parent=27 // pred_fallthru
          _
        // Predicated region
        $region41: #{feed_forward_block.1} parent=27 // pred_check
          %p291 = pneg %p174
        $region42: #{feed_forward_block.1} parent=27 // pred_check_branch
          %293 = sbr.rel (%p291) target = $region44
        $region43: #{feed_forward_block.1} parent=27 // pred_region
          %s294 = sand.u32 %s164, 1
          %s295 = scalar_lea.sflag [#allocation8], %s294
          %s296 = sand.u32 %s164, 1
          %s297 = smul.addr %s296, 128
          %s298 = scalar_lea.vmem [#allocation7], %s297
          %s299 = smul.u32 32, %s30
          %s301 = ssub.s32 2048, 2048
          %302 = vsyncadd %s295, %s301
          %s303 = smul.addr %s299, 64
          %s304 = scalar_lea.hbm %s5, %s303
          %s305 = sshll.u32 %s298, 4
          %s306 = int_to_ptr.vmem [resolvable:$true] %s305
          %311 = dma.hbm_to_vmem [thread:$0]  %s304, 2048, %s306, %s295, 64, 64, 4
        $region44: #{feed_forward_block.1} parent=27 // pred_fallthru
          _
      $region28: #{feed_forward_block.1} parent=5 // pred_fallthru
        _
      %p312 = scmp.le.s32.totalorder 1, %s22
      %p313 = scmp.lt.s32.totalorder %s22, 5
      %p314 = pnand %p312, %p313
      %p315 = pneg %p314
      // Predicated region
      $region45: #{feed_forward_block.1} parent=5 // pred_check
        _
      $region46: #{feed_forward_block.1} parent=5 // pred_check_branch
        %317 = sbr.rel (%p314) target = $region48
      $region47: #{feed_forward_block.1} parent=5 // pred_region
        %s318 = ssub.s32 %s22, 1
        %s319 = sand.u32 %s115, 1
        %s320 = scalar_lea.sflag [#allocation5], %s319
        %s321 = sand.u32 %s115, 1
        %s322 = smul.addr %s321, 128
        %s323 = scalar_lea.vmem [#allocation4], %s322
        // Predicated region
        $region49: #{feed_forward_block.1} parent=47 // pred_check
          %p324 = pneg %p128
        $region50: #{feed_forward_block.1} parent=47 // pred_check_branch
          %326 = sbr.rel (%p324) target = $region52
        $region51: #{feed_forward_block.1} parent=47 // pred_region
          %327 = dma.done %s320, 2048
        $region52: #{feed_forward_block.1} parent=47 // pred_fallthru
          _
        %s328 = sand.u32 %s167, 1
        %s329 = scalar_lea.sflag [#allocation8], %s328
        %s330 = sand.u32 %s167, 1
        %s331 = smul.addr %s330, 128
        %s332 = scalar_lea.vmem [#allocation7], %s331
        // Predicated region
        $region53: #{feed_forward_block.1} parent=47 // pred_check
          %p333 = pneg %p180
        $region54: #{feed_forward_block.1} parent=47 // pred_check_branch
          %335 = sbr.rel (%p333) target = $region56
        $region55: #{feed_forward_block.1} parent=47 // pred_region
          %336 = dma.done %s329, 2048
        $region56: #{feed_forward_block.1} parent=47 // pred_fallthru
          _
        %p337 = scmp.lt.s32.totalorder %s31, 1
        %s338 = scalar_select %p337, %s31, 1
        %s339 = smul.addr %s338, 8
        %s340 = scalar_lea.vmem %s0, %s339
        %p341 = pneg %p60
        %p342 = pneg %p57
        %p343 = pneg %p81
        %p344 = pneg %p78
        %p345 = pneg %p102
        %p346 = pneg %p99
        %s347 = sand.u32 %s115, 1
        %s348 = scalar_lea.sflag [#allocation5], %s347
        %s349 = sand.u32 %s115, 1
        %s350 = smul.addr %s349, 128
        %s351 = scalar_lea.vmem [#allocation4], %s350
        %p352 = pneg %p128
        %p353 = pneg %p125
        %s354 = smul.u32 2, %s32
        %p355 = scmp.lt.s32.totalorder %s354, 3
        %s356 = scalar_select %p355, %s354, 3
        %s357 = scalar_lea.vmem %s4, %s356
        %p358 = pneg %p154
        %p359 = pneg %p151
        %s360 = sand.u32 %s167, 1
        %s361 = scalar_lea.sflag [#allocation8], %s360
        %s362 = sand.u32 %s167, 1
        %s363 = smul.addr %s362, 128
        %s364 = scalar_lea.vmem [#allocation7], %s363
        %p365 = pneg %p180
        %p366 = pneg %p177
        %p367 = pneg %p201
        %p368 = pneg %p198
        %p369 = pneg %p227
        %p370 = pneg %p224
        %s371 = sand.u32 %s214, 1
        %s372 = scalar_lea.sflag [#allocation6], %s371
        %s373 = sand.u32 %s214, 1
        %s374 = smul.addr %s373, 8
        %s375 = scalar_lea.vmem [#allocation9], %s374
        %p376 = scmp.lt.s32.totalorder %s31, 1
        %s377 = scalar_select %p376, %s31, 1
        %s378 = smul.addr %s377, 8
        %s379 = scalar_lea.vmem %s0, %s378
        %s380 = smul.u32 2, %s32
        %s381 = smul.u32 2, %s32
        %p382 = scmp.lt.s32.totalorder %s381, 3
        %s383 = scalar_select %p382, %s381, 3
        %s384 = scalar_lea.vmem %s4, %s383
        %s385 = smul.u32 2, %s32
        %s386 = smul.u32 32, %s32
        %p388 = scmp.eq.s32.totalorder %s32, 0
        // Predicated region
        $region57: #{feed_forward_block.1} parent=47 // pred_check
          %p389 = pneg %p388
        $region58: #{feed_forward_block.1} parent=47 // pred_check_branch
          %391 = sbr.rel (%p389) target = $region60
        $region59: #{feed_forward_block.1} parent=47 // pred_region
          %v392 = vld [vmem:[%s379] sm:$0xff]
          %393 = vadd.xlane.f32.xlu0 %v392
          %v394 = vpop.xlane.xlu0 %393
          %v395 = vrcp.pop 128.0
          %v396 = vmul.f32 %v394, %v395
          %v397 = vsub.f32 %v392, %v396
          %v398 = vmul.f32 %v397, %v397
          %399 = vadd.xlane.f32.xlu0 %v398
          %v400 = vpop.xlane.xlu0 %399
          %v401 = vmul.f32 %v400, %v395
          %v402 = vadd.f32 %v401, 1e-05
          %v403 = vrsqrt.pop %v402
          %v404 = vmul.f32 %v397, %v403
          %v405 = vld [vmem:[%s1] sm:$0x1]
          %v407 = vlaneseq
          %v408 = vshrl.u32 %v407, 7
          %v409 = vsub.s32 0, %v408
          %v410 = vrot.slane %v405, %v409
          %v412 = vmul.f32 %v404, %v410
          %v413 = vld [vmem:[%s2] sm:$0x1]
          %v415 = vlaneseq
          %v416 = vshrl.u32 %v415, 7
          %v417 = vsub.s32 0, %v416
          %v418 = vrot.slane %v413, %v417
          %v420 = vadd.f32 %v412, %v418
          %v421 = vpack.c.bf16 %v420, %v420
          %422 = vst [vmem:[#allocation2] sm:$0xf] %v421
          %423 = vst [vmem:[#allocation3] sm:$0xff] 0.0
        $region60: #{feed_forward_block.1} parent=47 // pred_fallthru
          _
        %v424 = vld [vmem:[#allocation2] sm:$0xf]
        %v425 = vld [vmem:[%s323] sm:$0xff]
        %v426 = vld [vmem:[%s323 + $0x8] sm:$0xff]
        %v427 = vld [vmem:[%s323 + $0x10] sm:$0xff]
        %v428 = vld [vmem:[%s323 + $0x18] sm:$0xff]
        %v429 = vld [vmem:[%s323 + $0x20] sm:$0xff]
        %v430 = vld [vmem:[%s323 + $0x28] sm:$0xff]
        %v431 = vld [vmem:[%s323 + $0x30] sm:$0xff]
        %v432 = vld [vmem:[%s323 + $0x38] sm:$0xff]
        %v433 = vld [vmem:[%s323 + $0x40] sm:$0xff]
        %v434 = vld [vmem:[%s323 + $0x48] sm:$0xff]
        %v435 = vld [vmem:[%s323 + $0x50] sm:$0xff]
        %v436 = vld [vmem:[%s323 + $0x58] sm:$0xff]
        %v437 = vld [vmem:[%s323 + $0x60] sm:$0xff]
        %v438 = vld [vmem:[%s323 + $0x68] sm:$0xff]
        %v439 = vld [vmem:[%s323 + $0x70] sm:$0xff]
        %v440 = vld [vmem:[%s323 + $0x78] sm:$0xff]
        %v441 = vld [vmem:[%s384] sm:$0x3]
        %v443 = vlaneseq
        %v444 = vshrl.u32 %v443, 7
        %v445 = vsub.s32 0, %v444
        %v446 = vrot.slane %v441, %v445
        %v447 = vlaneseq
        %v448 = vshrl.u32 %v447, 7
        %v449 = vsub.s32 1, %v448
        %v450 = vrot.slane %v441, %v449
        %v469 = vunpack.c.l.b16 %v425
        %v470 = vunpack.c.h.b16 %v425
        %v471 = vunpack.c.l.b16 %v426
        %v472 = vunpack.c.h.b16 %v426
        %v473 = vunpack.c.l.b16 %v427
        %v474 = vunpack.c.h.b16 %v427
        %v475 = vunpack.c.l.b16 %v428
        %v476 = vunpack.c.h.b16 %v428
        %v477 = vunpack.c.l.b16 %v429
        %v478 = vunpack.c.h.b16 %v429
        %v479 = vunpack.c.l.b16 %v430
        %v480 = vunpack.c.h.b16 %v430
        %v481 = vunpack.c.l.b16 %v431
        %v482 = vunpack.c.h.b16 %v431
        %v483 = vunpack.c.l.b16 %v432
        %v484 = vunpack.c.h.b16 %v432
        %v485 = vunpack.c.l.b16 %v433
        %v486 = vunpack.c.h.b16 %v433
        %v487 = vunpack.c.l.b16 %v434
        %v488 = vunpack.c.h.b16 %v434
        %v489 = vunpack.c.l.b16 %v435
        %v490 = vunpack.c.h.b16 %v435
        %v491 = vunpack.c.l.b16 %v436
        %v492 = vunpack.c.h.b16 %v436
        %v493 = vunpack.c.l.b16 %v437
        %v494 = vunpack.c.h.b16 %v437
        %v495 = vunpack.c.l.b16 %v438
        %v496 = vunpack.c.h.b16 %v438
        %v497 = vunpack.c.l.b16 %v439
        %v498 = vunpack.c.h.b16 %v439
        %v499 = vunpack.c.l.b16 %v440
        %v500 = vunpack.c.h.b16 %v440
        %v501 = vpack.c.b16 %v471, %v469
        %v502 = vpack.c.b16 %v472, %v470
        %v503 = vpack.c.b16 %v475, %v473
        %v504 = vpack.c.b16 %v476, %v474
        %v505 = vpack.c.b16 %v479, %v477
        %v506 = vpack.c.b16 %v480, %v478
        %v507 = vpack.c.b16 %v483, %v481
        %v508 = vpack.c.b16 %v484, %v482
        %v509 = vpack.c.b16 %v487, %v485
        %v510 = vpack.c.b16 %v488, %v486
        %v511 = vpack.c.b16 %v491, %v489
        %v512 = vpack.c.b16 %v492, %v490
        %v513 = vpack.c.b16 %v495, %v493
        %v514 = vpack.c.b16 %v496, %v494
        %v515 = vpack.c.b16 %v499, %v497
        %v516 = vpack.c.b16 %v500, %v498
        %533 = vmatprep.subr.bf16.mxu0 %v502
        %534 = vmatpush1.bf16.msra.mxu0 %v501
        %535 = vmatprep.subr.bf16.mxu0 %v504
        %536 = vmatpush1.bf16.msra.mxu0 %v503
        %537 = vmatprep.subr.bf16.mxu0 %v506
        %538 = vmatpush1.bf16.msra.mxu0 %v505
        %539 = vmatprep.subr.bf16.mxu0 %v508
        %540 = vmatpush1.bf16.msra.mxu0 %v507
        %541 = vmatprep.subr.bf16.mxu0 %v510
        %542 = vmatpush1.bf16.msra.mxu0 %v509
        %543 = vmatprep.subr.bf16.mxu0 %v512
        %544 = vmatpush1.bf16.msra.mxu0 %v511
        %545 = vmatprep.subr.bf16.mxu0 %v514
        %546 = vmatpush1.bf16.msra.mxu0 %v513
        %547 = vmatprep.subr.bf16.mxu0 %v516
        %548 = vmatpush1.bf16.msra.mxu0 %v515
        %549 = vmatprep.subr.bf16.mxu0 0
        %550 = vmatpush1.bf16.msra.mxu0 0
        %551 = vmatprep.subr.bf16.mxu0 0
        %552 = vmatpush1.bf16.msra.mxu0 0
        %553 = vmatprep.subr.bf16.mxu0 0
        %554 = vmatpush1.bf16.msra.mxu0 0
        %555 = vmatprep.subr.bf16.mxu0 0
        %556 = vmatpush1.bf16.msra.mxu0 0
        %557 = vmatprep.subr.bf16.mxu0 0
        %558 = vmatpush1.bf16.msra.mxu0 0
        %559 = vmatprep.subr.bf16.mxu0 0
        %560 = vmatpush1.bf16.msra.mxu0 0
        %561 = vmatprep.subr.bf16.mxu0 0
        %562 = vmatpush1.bf16.msra.mxu0 0
        %563 = vmatprep.subr.bf16.mxu0 0
        %564 = vmatpush1.bf16.msra.mxu0 0
        %565 = vmatprep.mubr.bf16.mxu0 0
        %566 = vmatmul.mubr.bf16.gmra.mrb[0].mxu0 %v424
        %v567 = vpop.f32.mrb[0].mxu0
        %v568 = vadd.f32 %v446, %v567
        %v569 = vpop.f32.mrb[0].mxu0
        %v570 = vadd.f32 %v450, %v569
        %v571 = vpop.f32.mrb[0].mxu0
        %v572 = vpop.f32.mrb[0].mxu0
        %573 = vdwg.mxu0
        %v574 = vmul.f32 %v568, 0.5
        %v575 = vmul.f32 %v570, 0.5
        %v576 = vmul.f32 %v568, 0.044715
        %v577 = vmul.f32 %v570, 0.044715
        %v578 = vmul.f32 %v576, %v568
        %v579 = vmul.f32 %v577, %v570
        %v580 = vmul.f32 %v578, %v568
        %v581 = vmul.f32 %v579, %v570
        %v582 = vadd.f32 %v568, %v580
        %v583 = vadd.f32 %v570, %v581
        %v584 = vmul.f32 %v582, 0.7978846
        %v585 = vmul.f32 %v583, 0.7978846
        %v586 = vtanh.pop %v584
        %v587 = vtanh.pop %v585
        %v588 = vadd.f32 %v586, 1.0
        %v589 = vadd.f32 %v587, 1.0
        %v590 = vmul.f32 %v574, %v588
        %v591 = vmul.f32 %v575, %v589
        %v592 = vld [vmem:[#allocation3] sm:$0xff]
        %v593 = vpack.c.bf16 %v590, %v590
        %v594 = vpack.c.bf16 %v591, %v591
        %v595 = vld [vmem:[%s332] sm:$0xf]
        %v596 = vld [vmem:[%s332 + $0x4] sm:$0xf]
        %v597 = vld [vmem:[%s332 + $0x8] sm:$0xf]
        %v598 = vld [vmem:[%s332 + $0xc] sm:$0xf]
        %v599 = vld [vmem:[%s332 + $0x10] sm:$0xf]
        %v600 = vld [vmem:[%s332 + $0x14] sm:$0xf]
        %v601 = vld [vmem:[%s332 + $0x18] sm:$0xf]
        %v602 = vld [vmem:[%s332 + $0x1c] sm:$0xf]
        %v603 = vld [vmem:[%s332 + $0x20] sm:$0xf]
        %v604 = vld [vmem:[%s332 + $0x24] sm:$0xf]
        %v605 = vld [vmem:[%s332 + $0x28] sm:$0xf]
        %v606 = vld [vmem:[%s332 + $0x2c] sm:$0xf]
        %v607 = vld [vmem:[%s332 + $0x30] sm:$0xf]
        %v608 = vld [vmem:[%s332 + $0x34] sm:$0xf]
        %v609 = vld [vmem:[%s332 + $0x38] sm:$0xf]
        %v610 = vld [vmem:[%s332 + $0x3c] sm:$0xf]
        %v611 = vld [vmem:[%s332 + $0x40] sm:$0xf]
        %v612 = vld [vmem:[%s332 + $0x44] sm:$0xf]
        %v613 = vld [vmem:[%s332 + $0x48] sm:$0xf]
        %v614 = vld [vmem:[%s332 + $0x4c] sm:$0xf]
        %v615 = vld [vmem:[%s332 + $0x50] sm:$0xf]
        %v616 = vld [vmem:[%s332 + $0x54] sm:$0xf]
        %v617 = vld [vmem:[%s332 + $0x58] sm:$0xf]
        %v618 = vld [vmem:[%s332 + $0x5c] sm:$0xf]
        %v619 = vld [vmem:[%s332 + $0x60] sm:$0xf]
        %v620 = vld [vmem:[%s332 + $0x64] sm:$0xf]
        %v621 = vld [vmem:[%s332 + $0x68] sm:$0xf]
        %v622 = vld [vmem:[%s332 + $0x6c] sm:$0xf]
        %v623 = vld [vmem:[%s332 + $0x70] sm:$0xf]
        %v624 = vld [vmem:[%s332 + $0x74] sm:$0xf]
        %v625 = vld [vmem:[%s332 + $0x78] sm:$0xf]
        %v626 = vld [vmem:[%s332 + $0x7c] sm:$0xf]
        %v659 = vunpack.c.l.b16 %v595
        %v660 = vunpack.c.l.b16 %v596
        %v661 = vunpack.c.l.b16 %v597
        %v662 = vunpack.c.l.b16 %v598
        %v663 = vunpack.c.l.b16 %v599
        %v664 = vunpack.c.l.b16 %v600
        %v665 = vunpack.c.l.b16 %v601
        %v666 = vunpack.c.l.b16 %v602
        %v667 = vunpack.c.l.b16 %v603
        %v668 = vunpack.c.l.b16 %v604
        %v669 = vunpack.c.l.b16 %v605
        %v670 = vunpack.c.l.b16 %v606
        %v671 = vunpack.c.l.b16 %v607
        %v672 = vunpack.c.l.b16 %v608
        %v673 = vunpack.c.l.b16 %v609
        %v674 = vunpack.c.l.b16 %v610
        %v675 = vunpack.c.l.b16 %v611
        %v676 = vunpack.c.l.b16 %v612
        %v677 = vunpack.c.l.b16 %v613
        %v678 = vunpack.c.l.b16 %v614
        %v679 = vunpack.c.l.b16 %v615
        %v680 = vunpack.c.l.b16 %v616
        %v681 = vunpack.c.l.b16 %v617
        %v682 = vunpack.c.l.b16 %v618
        %v683 = vunpack.c.l.b16 %v619
        %v684 = vunpack.c.l.b16 %v620
        %v685 = vunpack.c.l.b16 %v621
        %v686 = vunpack.c.l.b16 %v622
        %v687 = vunpack.c.l.b16 %v623
        %v688 = vunpack.c.l.b16 %v624
        %v689 = vunpack.c.l.b16 %v625
        %v690 = vunpack.c.l.b16 %v626
        %v691 = vpack.c.b16 %v660, %v659
        %v692 = vpack.c.b16 %v662, %v661
        %v693 = vpack.c.b16 %v664, %v663
        %v694 = vpack.c.b16 %v666, %v665
        %v695 = vpack.c.b16 %v668, %v667
        %v696 = vpack.c.b16 %v670, %v669
        %v697 = vpack.c.b16 %v672, %v671
        %v698 = vpack.c.b16 %v674, %v673
        %v699 = vpack.c.b16 %v676, %v675
        %v700 = vpack.c.b16 %v678, %v677
        %v701 = vpack.c.b16 %v680, %v679
        %v702 = vpack.c.b16 %v682, %v681
        %v703 = vpack.c.b16 %v684, %v683
        %v704 = vpack.c.b16 %v686, %v685
        %v705 = vpack.c.b16 %v688, %v687
        %v706 = vpack.c.b16 %v690, %v689
        %723 = vmatprep.subr.bf16.mxu0 0
        %724 = vmatpush1.bf16.msra.mxu0 %v691
        %725 = vmatprep.subr.bf16.mxu0 0
        %726 = vmatpush1.bf16.msra.mxu0 %v692
        %727 = vmatprep.subr.bf16.mxu0 0
        %728 = vmatpush1.bf16.msra.mxu0 %v693
        %729 = vmatprep.subr.bf16.mxu0 0
        %730 = vmatpush1.bf16.msra.mxu0 %v694
        %731 = vmatprep.subr.bf16.mxu0 0
        %732 = vmatpush1.bf16.msra.mxu0 %v695
        %733 = vmatprep.subr.bf16.mxu0 0
        %734 = vmatpush1.bf16.msra.mxu0 %v696
        %735 = vmatprep.subr.bf16.mxu0 0
        %736 = vmatpush1.bf16.msra.mxu0 %v697
        %737 = vmatprep.subr.bf16.mxu0 0
        %738 = vmatpush1.bf16.msra.mxu0 %v698
        %739 = vmatprep.subr.bf16.mxu0 0
        %740 = vmatpush1.bf16.msra.mxu0 %v699
        %741 = vmatprep.subr.bf16.mxu0 0
        %742 = vmatpush1.bf16.msra.mxu0 %v700
        %743 = vmatprep.subr.bf16.mxu0 0
        %744 = vmatpush1.bf16.msra.mxu0 %v701
        %745 = vmatprep.subr.bf16.mxu0 0
        %746 = vmatpush1.bf16.msra.mxu0 %v702
        %747 = vmatprep.subr.bf16.mxu0 0
        %748 = vmatpush1.bf16.msra.mxu0 %v703
        %749 = vmatprep.subr.bf16.mxu0 0
        %750 = vmatpush1.bf16.msra.mxu0 %v704
        %751 = vmatprep.subr.bf16.mxu0 0
        %752 = vmatpush1.bf16.msra.mxu0 %v705
        %753 = vmatprep.subr.bf16.mxu0 0
        %754 = vmatpush1.bf16.msra.mxu0 %v706
        %755 = vmatprep.mubr.bf16.mxu0 %v594
        %756 = vmatmul.mubr.bf16.gmra.mrb[0].mxu0 %v593
        %v757 = vpop.f32.mrb[0].mxu0
        %v758 = vadd.f32 0.0, %v757
        %v759 = vpop.f32.mrb[0].mxu0
        %v760 = vpop.f32.mrb[0].mxu0
        %v761 = vpop.f32.mrb[0].mxu0
        %762 = vdwg.mxu0
        %v763 = vadd.f32 %v592, %v758
        %764 = vst [vmem:[#allocation3] sm:$0xff] %v763
        %p765 = scmp.eq.s32.totalorder %s32, 1
        // Predicated region
        $region61: #{feed_forward_block.1} parent=47 // pred_check
          %p766 = pneg %p765
        $region62: #{feed_forward_block.1} parent=47 // pred_check_branch
          %768 = sbr.rel (%p766) target = $region64
        $region63: #{feed_forward_block.1} parent=47 // pred_region
          %v769 = vld [vmem:[#allocation3] sm:$0xff]
          %v770 = vld [vmem:[%s6] sm:$0x1]
          %v772 = vlaneseq
          %v773 = vshrl.u32 %v772, 7
          %v774 = vsub.s32 0, %v773
          %v775 = vrot.slane %v770, %v774
          %v777 = vadd.f32 %v769, %v775
          %778 = vst [vmem:[%s375] sm:$0xff] %v777
        $region64: #{feed_forward_block.1} parent=47 // pred_fallthru
          _
        %s779 = sand.u32 %s214, 1
        %s780 = scalar_lea.sflag [#allocation6], %s779
        %s781 = sand.u32 %s214, 1
        %s782 = smul.addr %s781, 8
        %s783 = scalar_lea.vmem [#allocation9], %s782
        // Predicated region
        $region65: #{feed_forward_block.1} parent=47 // pred_check
          %p784 = pneg %p224
        $region66: #{feed_forward_block.1} parent=47 // pred_check_branch
          %786 = sbr.rel (%p784) target = $region68
        $region67: #{feed_forward_block.1} parent=47 // pred_region
          %s788 = ssub.s32 128, 128
          %789 = vsyncadd %s780, %s788
          %s790 = smul.addr %s31, 128
          %s791 = scalar_lea.hbm %s7, %s790
          %s793 = sshll.u32 %s783, 4
          %s794 = int_to_ptr.vmem [resolvable:$true] %s793
          %796 = dma.vmem_to_hbm [thread:$0]  %s794, 128, %s791, %s780
        $region68: #{feed_forward_block.1} parent=47 // pred_fallthru
          _
      $region48: #{feed_forward_block.1} parent=5 // pred_fallthru
        _
      %p797 = scmp.le.s32.totalorder 2, %s22
      // Predicated region
      $region69: #{feed_forward_block.1} parent=5 // pred_check
        %p798 = pneg %p797
      $region70: #{feed_forward_block.1} parent=5 // pred_check_branch
        %800 = sbr.rel (%p798) target = $region72
      $region71: #{feed_forward_block.1} parent=5 // pred_region
        %s801 = ssub.s32 %s22, 2
        // Predicated region
        $region73: #{feed_forward_block.1} parent=71 // pred_check
          %p802 = pneg %p230
        $region74: #{feed_forward_block.1} parent=71 // pred_check_branch
          %804 = sbr.rel (%p802) target = $region76
        $region75: #{feed_forward_block.1} parent=71 // pred_region
          %s805 = sand.u32 %s215, 1
          %s806 = scalar_lea.sflag [#allocation6], %s805
          %s807 = sand.u32 %s215, 1
          %s808 = smul.addr %s807, 8
          %s809 = scalar_lea.vmem [#allocation9], %s808
          %810 = dma.done %s806, 128
        $region76: #{feed_forward_block.1} parent=71 // pred_fallthru
          _
      $region72: #{feed_forward_block.1} parent=5 // pred_fallthru
        _
    $region6: #{feed_forward_block.1} parent=1 // loop_footer
      %s26 = sadd.s32 1, %s22
    $region7: #{feed_forward_block.1} parent=1 // loop_footer_branch
      %21 = sbr.rel target = $region3
    $region8: #{feed_forward_block.1} parent=1 // loop_exit
      _
    %811 = vsyncpa [#allocation5], 1
    %s812 = scalar_lea.sflag [#allocation5], 1
    %813 = vsyncpa %s812, 1
    %814 = vsyncpa [#allocation8], 1
    %s815 = scalar_lea.sflag [#allocation8], 1
    %816 = vsyncpa %s815, 1
    %817 = vsyncpa [#allocation6], 1
    %s818 = scalar_lea.sflag [#allocation6], 1
    %819 = vsyncpa %s818, 1

</llo_original>
